<compile_context>
chip_gen: v7x
topology: tpu7x:2x2x1
jax: 0.10.0
libtpu: 0.0.40
codegen_flags: <defaults>
</compile_context>

<pallas_src>
import jax
import jax.numpy as jnp
from jax import lax
from jax.experimental import pallas as pl
from jax.experimental.pallas import tpu as pltpu


def _round_up(x, m):
    return (x + m - 1) // m * m


def _patch_embed_kernel(p_ref, w_ref, pb_ref, o_ref):
    # p_ref : (TN, K_pad) bf16      w_ref : (K_pad, D) bf16
    # pb_ref: (TN, D)     f32       o_ref : (TN, D)    out dtype
    acc = jnp.dot(p_ref[...], w_ref[...], preferred_element_type=jnp.float32)
    o_ref[...] = (acc + pb_ref[...]).astype(o_ref.dtype)


def siglip_vision_embeddings(pixel_values, conv_weight, conv_bias, pos_embedding,
                             patch_size):
    """
    pixel_values : (B, C, H, W)    NCHW float32
    conv_weight  : (D, C, P, P)    PyTorch Conv2d (OIHW) weight layout
    conv_bias    : (D,)
    pos_embedding: (N, D)          nn.Embedding weight, N = (H//P)*(W//P)
    returns      : (B, N, D)  ==  Conv2d(x).flatten(2).transpose(1,2) + pos_emb
    """
    B, C, H, W = pixel_values.shape
    D = conv_weight.shape[0]
    P = patch_size
    nph, npw = H // P, W // P
    N = nph * npw
    K = C * P * P
    out_dtype = pixel_values.dtype

    # ---- tiling choices ------------------------------------------------------
    # Contraction dim padded to a lane-aligned multiple of 128 (zeros -> exact).
    K_pad = _round_up(K, 128)
    # Patch tile: multiple of 8 sublanes, <= 256 rows (MXU feed on v6e/v7x,
    # modest enough for v5e).  Prefer a tile that divides the padded patch
    # count so no padding is needed; otherwise pad N up to a tile multiple.
    N8 = _round_up(N, 8)
    TN = next((t for t in range(min(256, N8), 63, -8) if N8 % t == 0), None)
    if TN is None:
        TN = min(256, N8)
        N_pad = _round_up(N8, TN)
    else:
        N_pad = N8
    n_tiles = N_pad // TN

    # ---- XLA-side glue (fused transpose + cast + pad; no real compute) -------
    # TODO(synk): fuse the patch (im2col) relayout into the kernel (manual DMA
    # of pixel rows + in-VMEM flatten) to avoid one extra HBM round trip.
    x = pixel_values.reshape(B, C, nph, P, npw, P)
    patches = jnp.transpose(x, (0, 2, 4, 1, 3, 5)).reshape(B, N, K)
    patches = patches.astype(jnp.bfloat16)
    patches = jnp.pad(patches, ((0, 0), (0, N_pad - N), (0, K_pad - K)))

    # Conv weight (D, C, P, P) -> (K, D), zero-padded on K, bf16 for the MXU.
    w_mat = conv_weight.reshape(D, K).T.astype(jnp.bfloat16)
    w_mat = jnp.pad(w_mat, ((0, K_pad - K), (0, 0)))

    # Fold the conv bias into the position embedding (kept f32 for the epilogue).
    pos_bias = (pos_embedding.astype(jnp.float32)
                + conv_bias.astype(jnp.float32)[None, :])
    pos_bias = jnp.pad(pos_bias, ((0, N_pad - N), (0, 0)))

    # ---- VMEM budget: double-buffered inputs/outputs + headroom --------------
    est = 2 * (TN * K_pad * 2        # patch tile (bf16)
               + K_pad * D * 2       # weight (bf16)
               + TN * D * 4          # pos+bias tile (f32)
               + TN * D * 4)         # output tile (f32)
    vmem_limit = int(min(max(3 * est, 32 * 2 ** 20), 60 * 2 ** 20))

    out = pl.pallas_call(
        _patch_embed_kernel,
        out_shape=jax.ShapeDtypeStruct((B, N_pad, D), out_dtype),
        grid=(B, n_tiles),
        in_specs=[
            pl.BlockSpec((None, TN, K_pad), lambda b, n: (b, n, 0)),  # patches
            pl.BlockSpec((K_pad, D), lambda b, n: (0, 0)),            # weight
            pl.BlockSpec((TN, D), lambda b, n: (n, 0)),               # pos + bias
        ],
        out_specs=pl.BlockSpec((None, TN, D), lambda b, n: (b, n, 0)),
        compiler_params=pltpu.CompilerParams(
            dimension_semantics=("parallel", "parallel"),
            vmem_limit_bytes=vmem_limit,
        ),
    )(patches, w_mat, pos_bias)

    if N_pad != N:
        out = out[:, :N, :]
    return out


def _reference(pixel_values, conv_weight, conv_bias, pos_embedding, patch_size):
    # Pure-JAX reference using a real strided convolution (NCHW / OIHW).
    conv = lax.conv_general_dilated(
        pixel_values, conv_weight,
        window_strides=(patch_size, patch_size),
        padding="VALID",
        dimension_numbers=("NCHW", "OIHW", "NCHW"),
    ) + conv_bias[None, :, None, None]
    B, D, nph, npw = conv.shape
    emb = conv.reshape(B, D, nph * npw).transpose(0, 2, 1)   # flatten(2).transpose(1,2)
    return emb + pos_embedding[None, :, :]


if __name__ == "__main__":
    # Small config consistent with the module:
    #   hidden_size=32, num_channels=3, image_size=16, patch_size=4
    #   -> num_patches = (16//4)**2 = 16
    B, C, H, W = 2, 3, 16, 16
    D, P = 32, 4
    N = (H // P) * (W // P)

    key = jax.random.PRNGKey(0)
    k1, k2, k3, k4 = jax.random.split(key, 4)
    pixel_values = jax.random.normal(k1, (B, C, H, W), dtype=jnp.float32)
    conv_weight = 0.1 * jax.random.normal(k2, (D, C, P, P), dtype=jnp.float32)
    conv_bias = 0.1 * jax.random.normal(k3, (D,), dtype=jnp.float32)
    pos_embedding = 0.1 * jax.random.normal(k4, (N, D), dtype=jnp.float32)

    out = siglip_vision_embeddings(pixel_values, conv_weight, conv_bias,
                                   pos_embedding, P)
    out = jax.block_until_ready(out)

    ref = _reference(pixel_values, conv_weight, conv_bias, pos_embedding, P)
    assert out.shape == (B, N, D), out.shape
    # bf16 matmul inputs (f32 accumulation) -> slightly relaxed tolerance.
    assert jnp.allclose(out, ref, atol=3e-2, rtol=3e-2), "mismatch vs reference"
    print("KERNEL_OK")
</pallas_src>

<mosaic_0001>
module attributes {stable_mosaic.version = 11 : i64} {
  func.func @_patch_embed_kernel(%arg0: i32, %arg1: i32, %arg2: memref<1x16x128xbf16, #tpu.memory_space<vmem>>, %arg3: memref<128x32xbf16, #tpu.memory_space<vmem>>, %arg4: memref<16x32xf32, #tpu.memory_space<vmem>>, %arg5: memref<1x16x32xf32, #tpu.memory_space<vmem>>) attributes {dimension_semantics = [#tpu.dimension_semantics<parallel>, #tpu.dimension_semantics<parallel>], iteration_bounds = array<i64: 2, 1>, scalar_prefetch = 0 : i64, scratch_operands = 0 : i64, tpu.core_type = #tpu.core_type<tc>, window_params = [{transform_indices = @transform_0, window_bounds = array<i64: 1, 16, 128>}, {pipeline_mode = #tpu.pipeline_mode<synchronous>, transform_indices = @transform_1, window_bounds = array<i64: 128, 32>}, {transform_indices = @transform_2, window_bounds = array<i64: 16, 32>}, {transform_indices = @transform_3, window_bounds = array<i64: 1, 16, 32>}]} {
    %c0 = arith.constant 0 : index
    %c0_0 = arith.constant 0 : index
    %c0_1 = arith.constant 0 : index
    %0 = vector.load %arg2[%c0, %c0_0, %c0_1] : memref<1x16x128xbf16, #tpu.memory_space<vmem>>, vector<1x16x128xbf16>
    %1 = vector.shape_cast %0 : vector<1x16x128xbf16> to vector<16x128xbf16>
    %c0_2 = arith.constant 0 : index
    %c0_3 = arith.constant 0 : index
    %2 = vector.load %arg3[%c0_2, %c0_3] : memref<128x32xbf16, #tpu.memory_space<vmem>>, vector<128x32xbf16>
    %cst = arith.constant dense<0.000000e+00> : vector<16x32xf32>
    %3 = tpu.matmul %1, %2, %cst {dimension_numbers = #tpu.dot_dimension_numbers<[1], [0], [0], [1], [0, 0, 1, 1], [], []>} : vector<16x128xbf16>, vector<128x32xbf16>, vector<16x32xf32> -> vector<16x32xf32>
    %c0_4 = arith.constant 0 : index
    %c0_5 = arith.constant 0 : index
    %4 = vector.load %arg4[%c0_4, %c0_5] : memref<16x32xf32, #tpu.memory_space<vmem>>, vector<16x32xf32>
    %5 = arith.addf %3, %4 : vector<16x32xf32>
    %c0_6 = arith.constant 0 : index
    %c0_7 = arith.constant 0 : index
    %c0_8 = arith.constant 0 : index
    %6 = vector.load %arg5[%c0_6, %c0_7, %c0_8] : memref<1x16x32xf32, #tpu.memory_space<vmem>>, vector<1x16x32xf32>
    %7 = vector.shape_cast %6 : vector<1x16x32xf32> to vector<16x32xf32>
    %8 = vector.shape_cast %5 : vector<16x32xf32> to vector<1x16x32xf32>
    tpu.vector_store %arg5[%c0_6, %c0_7, %c0_8], %8 {strides = array<i32>} : memref<1x16x32xf32, #tpu.memory_space<vmem>>, vector<1x16x32xf32>,
    return
  }
  func.func @transform_0(%arg0: i32, %arg1: i32) -> (i32, i32, i32) {
    %c0_i32 = arith.constant 0 : i32
    %c0_i32_0 = arith.constant 0 : i32
    return %arg0, %arg1, %c0_i32 : i32, i32, i32
  }
  func.func @transform_1(%arg0: i32, %arg1: i32) -> (i32, i32) {
    %c0_i32 = arith.constant 0 : i32
    %c0_i32_0 = arith.constant 0 : i32
    %c0_i32_1 = arith.constant 0 : i32
    return %c0_i32, %c0_i32_0 : i32, i32
  }
  func.func @transform_2(%arg0: i32, %arg1: i32) -> (i32, i32) {
    %c0_i32 = arith.constant 0 : i32
    %c0_i32_0 = arith.constant 0 : i32
    return %arg1, %c0_i32 : i32, i32
  }
  func.func @transform_3(%arg0: i32, %arg1: i32) -> (i32, i32, i32) {
    %c0_i32 = arith.constant 0 : i32
    %c0_i32_0 = arith.constant 0 : i32
    return %arg0, %arg1, %c0_i32 : i32, i32, i32
  }
}

</mosaic_0001>

<llo_original>
// kernel: tpu_custom_call.1
$region0: #{tpu_custom_call.1}
  #allocation0 [shape = 'u32[]', space=smem, size = 0x4, offset = 0x4, fixed_abs, tag = 'smem constant byte address 0x4 - core index']
  #allocation1 [shape = 'u32[144,128]{1,0:T(1,128)}', space=vmem, size = 0x12000, scoped, tag = 'internal scratch']
  %s0 = inlined_call_operand.vmem [shape: bf16[2,16,128], index: 0, kind: input, shape index: {}]
  %s1 = inlined_call_operand.vmem [shape: bf16[128,32], index: 1, kind: input, shape index: {}]
  %s2 = inlined_call_operand.vmem [shape: f32[16,32], index: 2, kind: input, shape index: {}]
  %s3 = inlined_call_operand.hbm [shape: f32[2,16,32], index: 3, kind: output, shape index: {}]
  %s4 = sld [smem:[#allocation0]]
  $region45: #{tpu_custom_call.1} parent=0
    _
  %s6 = ssub.s32 1, %s4
  %s7 = scalar_select 0, %s6, %s4
  $region1: #{tpu_custom_call.1} parent=0
    #allocation2 [shape = 'u8[16384]{0}', space=vmem, size = 0x4000, scoped, tag = 'output window, operand 0']
    #allocation3 [shape = 's32[2]{0}', space=sflag, size = 0x8, scoped, tag = 'scoped memory for tpu_custom_call.1']
    %8 = vsyncpa [#allocation3], 0
    %s9 = scalar_lea.sflag [#allocation3], 1
    %10 = vsyncpa %s9, 0
    loop: start=0, step=1, limit=4
    $region2: #{tpu_custom_call.1} parent=1 // loop_pre_header
      _
    $region3: #{tpu_custom_call.1} parent=1 // loop_header
      %s12 = sphi 0, %s16
      %p13 = scmp.ge.s32.totalorder %s12, 4
      %s19 = sphi 0, %s31
      %s20 = sphi 0, %s27
      %s21 = sphi 0, %s19
      %s22 = sphi 0, %s20
      %s23 = sphi 0, %s21
      %s24 = sphi 0, %s22
      %s36 = sphi 0, %s38
      %s39 = sphi 0, %s36
      %s40 = sphi 0, %s39
      %s56 = sphi 0, %s40
      %s60 = sphi 0, %s60
      %s62 = sphi 0, %s60
      %s63 = sphi 0, %s62
      %s77 = sphi 0, %s63
      %s83 = sphi 0, %s85
      %s86 = sphi 0, %s83
      %s87 = sphi 0, %s86
      %s103 = sphi 0, %s87
      %s111 = sphi 0, %s113
      %s114 = sphi 0, %s111
      %s115 = sphi 0, %s114
      %s131 = sphi 0, %s115
    $region4: #{tpu_custom_call.1} parent=1 // loop_header_branch
      %15 = sbr.rel (%p13) target = $region8
    $region5: #{tpu_custom_call.1} parent=1 // loop_body
      %s17 = ssub.s32 %s12, 1
      %s18 = ssub.s32 %s12, 2
      %s25 = sadd.s32 1, %s20
      %p26 = scmp.ge.s32.totalorder %s25, 1
      %s27 = scalar_select %p26, 0, %s25
      %s28 = sadd.s32 1, %s19
      %s29 = scalar_select %p26, %s28, %s19
      %p30 = scmp.ge.s32.totalorder %s29, 2
      %s31 = scalar_select %p30, 0, %s29
      %s32 = ssub.s32 %s19, %s31
      %s33 = ssub.s32 %s20, %s27
      %s34 = sor.u32 %s32, %s33
      %p35 = scmp.eq.s32.totalorder %s34, 0
      %s37 = sadd.s32 %s36, 1
      %s38 = scalar_select %p35, %s36, %s37
      %p41 = pneg %p35
      %p42 = scmp.eq.s32.totalorder %s12, 1
      %p43 = por %p41, %p42
      %p44 = scmp.ne.s32.totalorder %s36, %s39
      %p45 = scmp.eq.s32.totalorder %s12, 0
      %p46 = por %p44, %p45
      %p47 = scmp.ne.s32.totalorder %s36, %s39
      %p48 = scmp.eq.s32.totalorder %s17, 1
      %p49 = por %p47, %p48
      %p50 = scmp.ne.s32.totalorder %s39, %s40
      %p51 = scmp.eq.s32.totalorder %s17, 0
      %p52 = por %p50, %p51
      %p53 = scmp.ne.s32.totalorder %s39, %s40
      %p54 = scmp.eq.s32.totalorder %s18, 1
      %p55 = por %p53, %p54
      %p57 = scmp.ne.s32.totalorder %s40, %s56
      %p58 = scmp.eq.s32.totalorder %s18, 0
      %p59 = por %p57, %p58
      %s61 = sadd.s32 %s60, 1
      %p64 = scmp.eq.s32.totalorder %s12, 1
      %p65 = scmp.ne.s32.totalorder %s60, %s62
      %p66 = scmp.eq.s32.totalorder %s12, 0
      %p67 = por %p65, %p66
      %p68 = scmp.ne.s32.totalorder %s60, %s62
      %p69 = scmp.eq.s32.totalorder %s17, 1
      %p70 = por %p68, %p69
      %p71 = scmp.ne.s32.totalorder %s62, %s63
      %p72 = scmp.eq.s32.totalorder %s17, 0
      %p73 = por %p71, %p72
      %p74 = scmp.ne.s32.totalorder %s62, %s63
      %p75 = scmp.eq.s32.totalorder %s18, 1
      %p76 = por %p74, %p75
      %p78 = scmp.ne.s32.totalorder %s63, %s77
      %p79 = scmp.eq.s32.totalorder %s18, 0
      %p80 = por %p78, %p79
      %s81 = ssub.s32 %s20, %s27
      %p82 = scmp.eq.s32.totalorder %s81, 0
      %s84 = sadd.s32 %s83, 1
      %s85 = scalar_select %p82, %s83, %s84
      %p88 = pneg %p82
      %p89 = scmp.eq.s32.totalorder %s12, 1
      %p90 = por %p88, %p89
      %p91 = scmp.ne.s32.totalorder %s83, %s86
      %p92 = scmp.eq.s32.totalorder %s12, 0
      %p93 = por %p91, %p92
      %p94 = scmp.ne.s32.totalorder %s83, %s86
      %p95 = scmp.eq.s32.totalorder %s17, 1
      %p96 = por %p94, %p95
      %p97 = scmp.ne.s32.totalorder %s86, %s87
      %p98 = scmp.eq.s32.totalorder %s17, 0
      %p99 = por %p97, %p98
      %p100 = scmp.ne.s32.totalorder %s86, %s87
      %p101 = scmp.eq.s32.totalorder %s18, 1
      %p102 = por %p100, %p101
      %p104 = scmp.ne.s32.totalorder %s87, %s103
      %p105 = scmp.eq.s32.totalorder %s18, 0
      %p106 = por %p104, %p105
      %s107 = ssub.s32 %s19, %s31
      %s108 = ssub.s32 %s20, %s27
      %s109 = sor.u32 %s107, %s108
      %p110 = scmp.eq.s32.totalorder %s109, 0
      %s112 = sadd.s32 %s111, 1
      %s113 = scalar_select %p110, %s111, %s112
      %p116 = pneg %p110
      %p117 = scmp.eq.s32.totalorder %s12, 1
      %p118 = por %p116, %p117
      %p119 = scmp.ne.s32.totalorder %s111, %s114
      %p120 = scmp.eq.s32.totalorder %s12, 0
      %p121 = por %p119, %p120
      %p122 = scmp.ne.s32.totalorder %s111, %s114
      %p123 = scmp.eq.s32.totalorder %s17, 1
      %p124 = por %p122, %p123
      %p125 = scmp.ne.s32.totalorder %s114, %s115
      %p126 = scmp.eq.s32.totalorder %s17, 0
      %p127 = por %p125, %p126
      %p128 = scmp.ne.s32.totalorder %s114, %s115
      %p129 = scmp.eq.s32.totalorder %s18, 1
      %p130 = por %p128, %p129
      %p132 = scmp.ne.s32.totalorder %s115, %s131
      %p133 = scmp.eq.s32.totalorder %s18, 0
      %p134 = por %p132, %p133
      %p135 = scmp.le.s32.totalorder 1, %s12
      %p136 = scmp.lt.s32.totalorder %s12, 3
      %p137 = pnand %p135, %p136
      %p138 = pneg %p137
      // Predicated region
      $region9: #{tpu_custom_call.1} parent=5 // pred_check
        _
      $region10: #{tpu_custom_call.1} parent=5 // pred_check_branch
        %140 = sbr.rel (%p137) target = $region12
      $region11: #{tpu_custom_call.1} parent=5 // pred_region
        %s141 = ssub.s32 %s12, 1
        // Predicated region
        $region13: #{tpu_custom_call.1} parent=11 // pred_check
          %p142 = pneg %p73
        $region14: #{tpu_custom_call.1} parent=11 // pred_check_branch
          %144 = sbr.rel (%p142) target = $region16
        $region15: #{tpu_custom_call.1} parent=11 // pred_region
          _
        $region16: #{tpu_custom_call.1} parent=11 // pred_fallthru
          _
        // Predicated region
        $region17: #{tpu_custom_call.1} parent=11 // pred_check
          %p145 = pneg %p99
        $region18: #{tpu_custom_call.1} parent=11 // pred_check_branch
          %147 = sbr.rel (%p145) target = $region20
        $region19: #{tpu_custom_call.1} parent=11 // pred_region
          %s148 = smul.u32 2, %s22
          %p149 = scmp.lt.s32.totalorder %s148, 1
          %s150 = scalar_select %p149, %s148, 1
          %s151 = smul.addr %s150, 8
          %s152 = scalar_lea.vmem %s2, %s151
          %s153 = smul.u32 2, %s22
        $region20: #{tpu_custom_call.1} parent=11 // pred_fallthru
          _
      $region12: #{tpu_custom_call.1} parent=5 // pred_fallthru
        _
      %p154 = scmp.lt.s32.totalorder %s12, 2
      // Predicated region
      $region21: #{tpu_custom_call.1} parent=5 // pred_check
        %p155 = pneg %p154
      $region22: #{tpu_custom_call.1} parent=5 // pred_check_branch
        %157 = sbr.rel (%p155) target = $region24
      $region23: #{tpu_custom_call.1} parent=5 // pred_region
        // Predicated region
        $region25: #{tpu_custom_call.1} parent=23 // pred_check
          %p158 = pneg %p46
        $region26: #{tpu_custom_call.1} parent=23 // pred_check_branch
          %160 = sbr.rel (%p158) target = $region28
        $region27: #{tpu_custom_call.1} parent=23 // pred_region
          %s161 = smul.u32 2, %s20
          %p162 = scmp.lt.s32.totalorder %s19, 1
          %s163 = scalar_select %p162, %s19, 1
          %p164 = scmp.lt.s32.totalorder %s161, 1
          %s165 = scalar_select %p164, %s161, 1
          %s166 = smul.addr %s163, 2
          %s167 = sadd.s32 %s165, %s166
          %s168 = smul.addr %s167, 4
          %s169 = scalar_lea.vmem %s0, %s168
          %s170 = smul.u32 2, %s20
        $region28: #{tpu_custom_call.1} parent=23 // pred_fallthru
          _
      $region24: #{tpu_custom_call.1} parent=5 // pred_fallthru
        _
      %p171 = scmp.le.s32.totalorder 1, %s12
      %p172 = scmp.lt.s32.totalorder %s12, 3
      %p173 = pnand %p171, %p172
      %p174 = pneg %p173
      // Predicated region
      $region29: #{tpu_custom_call.1} parent=5 // pred_check
        _
      $region30: #{tpu_custom_call.1} parent=5 // pred_check_branch
        %176 = sbr.rel (%p173) target = $region32
      $region31: #{tpu_custom_call.1} parent=5 // pred_region
        %s177 = ssub.s32 %s12, 1
        %s178 = smul.u32 2, %s22
        %p179 = scmp.lt.s32.totalorder %s21, 1
        %s180 = scalar_select %p179, %s21, 1
        %p181 = scmp.lt.s32.totalorder %s178, 1
        %s182 = scalar_select %p181, %s178, 1
        %s183 = smul.addr %s180, 2
        %s184 = sadd.s32 %s182, %s183
        %s185 = smul.addr %s184, 4
        %s186 = scalar_lea.vmem %s0, %s185
        %p187 = pneg %p52
        %p188 = pneg %p49
        %p189 = pneg %p73
        %p190 = pneg %p70
        %s191 = smul.u32 2, %s22
        %p192 = scmp.lt.s32.totalorder %s191, 1
        %s193 = scalar_select %p192, %s191, 1
        %s194 = smul.addr %s193, 8
        %s195 = scalar_lea.vmem %s2, %s194
        %p196 = pneg %p99
        %p197 = pneg %p96
        %p198 = pneg %p127
        %p199 = pneg %p124
        %s200 = sand.u32 %s114, 1
        %s201 = scalar_lea.sflag [#allocation3], %s200
        %s202 = sand.u32 %s114, 1
        %s203 = smul.addr %s202, 16
        %s204 = scalar_lea.vmem [#allocation2], %s203
        %s205 = smul.u32 2, %s22
        %p206 = scmp.lt.s32.totalorder %s21, 1
        %s207 = scalar_select %p206, %s21, 1
        %p208 = scmp.lt.s32.totalorder %s205, 1
        %s209 = scalar_select %p208, %s205, 1
        %s210 = smul.addr %s207, 2
        %s211 = sadd.s32 %s209, %s210
        %s212 = smul.addr %s211, 4
        %s213 = scalar_lea.vmem %s0, %s212
        %s214 = smul.u32 2, %s22
        %s215 = smul.u32 2, %s22
        %p216 = scmp.lt.s32.totalorder %s215, 1
        %s217 = scalar_select %p216, %s215, 1
        %s218 = smul.addr %s217, 8
        %s219 = scalar_lea.vmem %s2, %s218
        %s220 = smul.u32 2, %s22
        %s221 = smul.u32 2, %s22
        %v223 = vld [vmem:[%s213] sm:$0xf]
        %v224 = vld [vmem:[%s213 + $0x4] sm:$0xf]
        %v225 = vld [vmem:[%s1] sm:$0xf]
        %v226 = vld [vmem:[%s1 + $0x4] sm:$0xf]
        %v227 = vld [vmem:[%s1 + $0x8] sm:$0xf]
        %v228 = vld [vmem:[%s1 + $0xc] sm:$0xf]
        %v229 = vld [vmem:[%s1 + $0x10] sm:$0xf]
        %v230 = vld [vmem:[%s1 + $0x14] sm:$0xf]
        %v231 = vld [vmem:[%s1 + $0x18] sm:$0xf]
        %v232 = vld [vmem:[%s1 + $0x1c] sm:$0xf]
        %v233 = vld [vmem:[%s1 + $0x20] sm:$0xf]
        %v234 = vld [vmem:[%s1 + $0x24] sm:$0xf]
        %v235 = vld [vmem:[%s1 + $0x28] sm:$0xf]
        %v236 = vld [vmem:[%s1 + $0x2c] sm:$0xf]
        %v237 = vld [vmem:[%s1 + $0x30] sm:$0xf]
        %v238 = vld [vmem:[%s1 + $0x34] sm:$0xf]
        %v239 = vld [vmem:[%s1 + $0x38] sm:$0xf]
        %v240 = vld [vmem:[%s1 + $0x3c] sm:$0xf]
        %v241 = vld [vmem:[%s219] sm:$0xff]
        %v242 = vld [vmem:[%s219 + $0x8] sm:$0xff]
        %v245 = vunpack.c.l.b16 %v223
        %v246 = vunpack.c.l.b16 %v224
        %v247 = vpack.c.b16 %v246, %v245
        %v265 = vunpack.c.l.b16 %v225
        %v266 = vunpack.c.l.b16 %v226
        %v267 = vunpack.c.l.b16 %v227
        %v268 = vunpack.c.l.b16 %v228
        %v269 = vunpack.c.l.b16 %v229
        %v270 = vunpack.c.l.b16 %v230
        %v271 = vunpack.c.l.b16 %v231
        %v272 = vunpack.c.l.b16 %v232
        %v273 = vunpack.c.l.b16 %v233
        %v274 = vunpack.c.l.b16 %v234
        %v275 = vunpack.c.l.b16 %v235
        %v276 = vunpack.c.l.b16 %v236
        %v277 = vunpack.c.l.b16 %v237
        %v278 = vunpack.c.l.b16 %v238
        %v279 = vunpack.c.l.b16 %v239
        %v280 = vunpack.c.l.b16 %v240
        %v281 = vpack.c.b16 %v266, %v265
        %v282 = vpack.c.b16 %v268, %v267
        %v283 = vpack.c.b16 %v270, %v269
        %v284 = vpack.c.b16 %v272, %v271
        %v285 = vpack.c.b16 %v274, %v273
        %v286 = vpack.c.b16 %v276, %v275
        %v287 = vpack.c.b16 %v278, %v277
        %v288 = vpack.c.b16 %v280, %v279
        %297 = vmatprep.subr.bf16.mxu0 0
        %298 = vmatpush1.bf16.msra.mxu0 %v281
        %299 = vmatprep.subr.bf16.mxu0 0
        %300 = vmatpush1.bf16.msra.mxu0 %v282
        %301 = vmatprep.subr.bf16.mxu0 0
        %302 = vmatpush1.bf16.msra.mxu0 %v283
        %303 = vmatprep.subr.bf16.mxu0 0
        %304 = vmatpush1.bf16.msra.mxu0 %v284
        %305 = vmatprep.subr.bf16.mxu0 0
        %306 = vmatpush1.bf16.msra.mxu0 %v285
        %307 = vmatprep.subr.bf16.mxu0 0
        %308 = vmatpush1.bf16.msra.mxu0 %v286
        %309 = vmatprep.subr.bf16.mxu0 0
        %310 = vmatpush1.bf16.msra.mxu0 %v287
        %311 = vmatprep.subr.bf16.mxu0 0
        %312 = vmatpush1.bf16.msra.mxu0 %v288
        %313 = vmatprep.subr.bf16.mxu0 0
        %314 = vmatpush1.bf16.msra.mxu0 0
        %315 = vmatprep.subr.bf16.mxu0 0
        %316 = vmatpush1.bf16.msra.mxu0 0
        %317 = vmatprep.subr.bf16.mxu0 0
        %318 = vmatpush1.bf16.msra.mxu0 0
        %319 = vmatprep.subr.bf16.mxu0 0
        %320 = vmatpush1.bf16.msra.mxu0 0
        %321 = vmatprep.subr.bf16.mxu0 0
        %322 = vmatpush1.bf16.msra.mxu0 0
        %323 = vmatprep.subr.bf16.mxu0 0
        %324 = vmatpush1.bf16.msra.mxu0 0
        %325 = vmatprep.subr.bf16.mxu0 0
        %326 = vmatpush1.bf16.msra.mxu0 0
        %327 = vmatprep.subr.bf16.mxu0 0
        %328 = vmatpush1.bf16.msra.mxu0 0
        %329 = vmatprep.mubr.bf16.mxu0 0
        %330 = vmatmul.mubr.bf16.gmra.mrb[0].mxu0 %v247
        %v331 = vpop.f32.mrb[0].mxu0
        %v332 = vadd.f32 %v241, %v331
        %v333 = vpop.f32.mrb[0].mxu0
        %v334 = vpop.f32.mrb[0].mxu0
        %v335 = vadd.f32 %v242, %v334
        %v336 = vpop.f32.mrb[0].mxu0
        %337 = vdwg.mxu0
        %vm338 = vcmask 261120
        %339 = vst.msk [vmem:[%s204] sm:$0xff] %vm338, %v332
        %340 = vst.msk [vmem:[%s204 + $0x8] sm:$0xff] %vm338, %v335
        %s341 = sand.u32 %s114, 1
        %s342 = scalar_lea.sflag [#allocation3], %s341
        %s343 = sand.u32 %s114, 1
        %s344 = smul.addr %s343, 16
        %s345 = scalar_lea.vmem [#allocation2], %s344
        // Predicated region
        $region33: #{tpu_custom_call.1} parent=31 // pred_check
          %p346 = pneg %p124
        $region34: #{tpu_custom_call.1} parent=31 // pred_check_branch
          %348 = sbr.rel (%p346) target = $region36
        $region35: #{tpu_custom_call.1} parent=31 // pred_region
          %s349 = smul.u32 2, %s22
          %s351 = ssub.s32 256, 256
          %352 = vsyncadd %s342, %s351
          %s353 = smul.addr %s21, 2
          %s354 = sadd.s32 %s349, %s353
          %s355 = smul.addr %s354, 128
          %s356 = scalar_lea.hbm %s3, %s355
          %s357 = sshll.u32 %s345, 4
          %s358 = int_to_ptr.vmem [resolvable:$true] %s357
          %363 = dma.vmem_to_hbm [thread:$0]  %s358, 256, %s356, %s342, 128, 128, 8
        $region36: #{tpu_custom_call.1} parent=31 // pred_fallthru
          _
      $region32: #{tpu_custom_call.1} parent=5 // pred_fallthru
        _
      %p364 = scmp.le.s32.totalorder 2, %s12
      // Predicated region
      $region37: #{tpu_custom_call.1} parent=5 // pred_check
        %p365 = pneg %p364
      $region38: #{tpu_custom_call.1} parent=5 // pred_check_branch
        %367 = sbr.rel (%p365) target = $region40
      $region39: #{tpu_custom_call.1} parent=5 // pred_region
        %s368 = ssub.s32 %s12, 2
        // Predicated region
        $region41: #{tpu_custom_call.1} parent=39 // pred_check
          %p369 = pneg %p130
        $region42: #{tpu_custom_call.1} parent=39 // pred_check_branch
          %371 = sbr.rel (%p369) target = $region44
        $region43: #{tpu_custom_call.1} parent=39 // pred_region
          %s372 = sand.u32 %s115, 1
          %s373 = scalar_lea.sflag [#allocation3], %s372
          %s374 = sand.u32 %s115, 1
          %s375 = smul.addr %s374, 16
          %s376 = scalar_lea.vmem [#allocation2], %s375
          %377 = dma.done %s373, 256
        $region44: #{tpu_custom_call.1} parent=39 // pred_fallthru
          _
      $region40: #{tpu_custom_call.1} parent=5 // pred_fallthru
        _
    $region6: #{tpu_custom_call.1} parent=1 // loop_footer
      %s16 = sadd.s32 1, %s12
    $region7: #{tpu_custom_call.1} parent=1 // loop_footer_branch
      %11 = sbr.rel target = $region3
    $region8: #{tpu_custom_call.1} parent=1 // loop_exit
      _
    %378 = vsyncpa [#allocation3], 1
    %s379 = scalar_lea.sflag [#allocation3], 1
    %380 = vsyncpa %s379, 1

</llo_original>
